<compile_context>
chip_gen: v7x
topology: tpu7x:2x2x1
jax: 0.10.0
libtpu: 0.0.40
codegen_flags: <defaults>
</compile_context>

<pallas_src>
import functools
import math

import jax
import jax.numpy as jnp
from jax.experimental import pallas as pl
from jax.experimental.pallas import tpu as pltpu


def _round_up(x: int, m: int) -> int:
    return ((x + m - 1) // m) * m


def _fold_factor(in_dim: int, max_fold: int = 8) -> int:
    """How many batch rows to pack into one lane-dense (multiple-of-128) row."""
    if in_dim % 128 == 0:
        return 1
    f = 128 // math.gcd(in_dim, 128)  # smallest f with (in_dim * f) % 128 == 0
    return f if f <= max_fold else 1


def _make_probe_kernel(num_layers: int):
    """Fused MLP kernel on one batch tile: (Linear -> ReLU)^(L-1) -> Linear."""

    def kernel(x_ref, *rest):
        o_ref = rest[-1]
        param_refs = rest[:-1]  # interleaved: w0, b0, w1, b1, ...

        # Dropout(p=0.8) is identity in eval mode (deterministic forward).
        # TODO(synk): training-mode dropout (mask * 1/(1-p)) would use
        # pltpu.prng_seed / pltpu.prng_random_bits if stochastic training
        # semantics are ever needed.
        h = x_ref[...]

        for i in range(num_layers):
            w = param_refs[2 * i][...]                           # (in, out), storage dtype
            b = param_refs[2 * i + 1][...].astype(jnp.float32)   # (1, out) -> f32
            # Feed the MXU in the weights' storage dtype (bf16 stays bf16 ->
            # native bf16 matmul, f32 accumulation). Bias add / ReLU in f32
            # (v5e has no bf16 VPU; these VPU ops hide under the x DMA).
            h = jnp.dot(h.astype(w.dtype), w,
                        preferred_element_type=jnp.float32) + b
            if i < num_layers - 1:
                h = jnp.maximum(h, 0.0)  # clamp(min=0)

        o_ref[...] = h.astype(o_ref.dtype)

    return kernel


@functools.partial(jax.jit, static_argnames=("block_rows",))
def probe_forward(x, params, *, block_rows=None):
    """Probe forward pass.

    x: (B, input_dim).
    params: list of (w, b) per layer, w shaped (in_features, out_features)
            (PyTorch weight transposed), b shaped (1, out_features).
    block_rows: optional tile size in *original* batch rows; None = auto-size
            for ~2 MiB of x per grid step.
    """
    num_layers = len(params)
    B, in_dim = x.shape
    out_dim = params[-1][0].shape[1]
    dtype = x.dtype
    itemsize = jnp.dtype(dtype).itemsize

    # ---- Lane-density fold: pack `fold` batch rows into one 128-lane row ----
    fold = _fold_factor(in_dim)
    Bp = _round_up(B, fold)
    if Bp != B:
        x = jnp.pad(x, ((0, Bp - B), (0, 0)))   # zero rows; sliced off at the end
    Bf = Bp // fold
    in_f = in_dim * fold
    xf = x.reshape(Bf, in_f)                    # free row-major reshape

    # Block-diagonal weight replication (kron with identity) + tiled biases so
    # the folded rows go through the exact same affine map independently.
    fparams = []
    for (w, b) in params:
        if fold > 1:
            wf = jnp.kron(jnp.eye(fold, dtype=w.dtype), w)   # (in*f, out*f)
            bf = jnp.tile(b, (1, fold))                      # (1, out*f)
        else:
            wf, bf = w, b
        fparams.append((wf, bf))
    out_f = out_dim * fold

    # ---- Batch tile sizing --------------------------------------------------
    sub = 16 if dtype == jnp.bfloat16 else 8
    target_bytes = 2 << 20  # ~2 MiB of x per grid step keeps DMA on roofline
    if block_rows is None:
        tb = max(sub, _round_up(target_bytes // (in_f * itemsize), sub))
    else:
        tb = max(sub, _round_up(pl.cdiv(block_rows, fold), sub))
    # Keep the grid length >= 2 when there are enough rows so ("parallel",)
    # actually feeds both v7x TensorCores (no-op on v5e/v6e).
    if Bf > 2 * sub:
        tb = min(tb, _round_up(pl.cdiv(Bf, 2), sub))
    tb = min(tb, _round_up(Bf, sub))

    # VMEM budget: account for (8,128)-tile padding and double-buffering and
    # shrink the tile until it fits comfortably (headroom for v7x 64 MiB VMEM).
    def _tile_bytes(rows, cols, isz, nbuf):
        return _round_up(max(rows, 1), sub) * _round_up(cols, 128) * isz * nbuf

    hidden_dims = [w_.shape[1] for (w_, _) in fparams]

    def _vmem_estimate(t):
        est = _tile_bytes(t, in_f, itemsize, 2)          # x tile, double-buffered
        est += _tile_bytes(t, out_f, itemsize, 2)        # out tile, double-buffered
        for d in hidden_dims:                            # f32 intermediates
            est += _tile_bytes(t, d, 4, 1)
        for (wf, bf) in fparams:                         # resident params
            est += _tile_bytes(wf.shape[0], wf.shape[1], wf.dtype.itemsize, 2)
            est += _tile_bytes(1, bf.shape[1], bf.dtype.itemsize, 2)
        return est

    vmem_budget = 24 << 20
    while tb > sub and _vmem_estimate(tb) > vmem_budget:
        tb = max(sub, _round_up(tb // 2, sub))

    grid = (pl.cdiv(Bf, tb),)

    # ---- Specs ---------------------------------------------------------------
    flat_params = []
    in_specs = [pl.BlockSpec((tb, in_f), lambda i: (i, 0))]
    for wf, bf in fparams:
        flat_params.append(wf)
        flat_params.append(bf)
        # Constant block index -> params stay resident in VMEM across the grid.
        # (pl.Buffered(1) on these would reclaim a few KiB; skipped — negligible.)
        in_specs.append(pl.BlockSpec(wf.shape, lambda i: (0, 0)))
        in_specs.append(pl.BlockSpec(bf.shape, lambda i: (0, 0)))

    out_specs = pl.BlockSpec((tb, out_f), lambda i: (i, 0))

    # Advisory cost estimate for XLA's scheduler.
    flops = 0
    param_bytes = 0
    for wf, bf in fparams:
        flops += 2 * Bf * wf.shape[0] * wf.shape[1]
        param_bytes += wf.size * wf.dtype.itemsize + bf.size * bf.dtype.itemsize
    bytes_accessed = (xf.size * itemsize
                      + Bf * out_f * itemsize
                      + param_bytes)

    kernel = _make_probe_kernel(num_layers)
    out_folded = pl.pallas_call(
        kernel,
        out_shape=jax.ShapeDtypeStruct((Bf, out_f), dtype),
        grid=grid,
        in_specs=in_specs,
        out_specs=out_specs,
        compiler_params=pltpu.CompilerParams(
            dimension_semantics=("parallel",),   # v7x: shard batch over both TCs
            vmem_limit_bytes=48 << 20),          # raise scoped VMEM; < 64 MiB v7x physical
        cost_estimate=pl.CostEstimate(
            flops=flops, transcendentals=0, bytes_accessed=bytes_accessed),
    )(xf, *flat_params)

    out = out_folded.reshape(Bp, out_dim)        # free row-major unfold
    if Bp != B:
        out = out[:B]
    return out


def init_probe_params(key, input_dim, output_dim, hidden_size=64, num_layers=1,
                      dtype=jnp.float32):
    """Deterministic parameter init mirroring the module's layer shapes.

    Layer i: Linear(prev, next) with next = hidden_size for i < num_layers-1
    else output_dim. Weights stored as (in, out) for the kernel.
    """
    params = []
    prev = input_dim
    for layer_id in range(num_layers):
        nxt = hidden_size if layer_id < num_layers - 1 else output_dim
        key, kw, kb = jax.random.split(key, 3)
        bound = 1.0 / jnp.sqrt(prev)  # PyTorch Linear default init scale
        w = jax.random.uniform(kw, (prev, nxt), jnp.float32, -bound, bound)
        b = jax.random.uniform(kb, (1, nxt), jnp.float32, -bound, bound)
        params.append((w.astype(dtype), b.astype(dtype)))
        prev = hidden_size
    return params


def probe_reference(x, params):
    """Plain-JAX reference with the same dtype behaviour as the kernel."""
    h = x
    for i, (w, b) in enumerate(params):
        h = jnp.dot(h.astype(w.dtype), w,
                    preferred_element_type=jnp.float32) + b.astype(jnp.float32)
        if i < len(params) - 1:
            h = jnp.maximum(h, 0.0)
    return h.astype(x.dtype)


if __name__ == "__main__":
    key = jax.random.PRNGKey(0)

    input_dim, hidden, out_dim = 32, 64, 16

    # --- Test 1: f32, 2-layer probe (Linear -> ReLU -> Linear), small batch ----
    batch = 8
    key, kx = jax.random.split(key)
    x = jax.random.normal(kx, (batch, input_dim), jnp.float32)
    key, kp = jax.random.split(key)
    params = init_probe_params(kp, input_dim, out_dim,
                               hidden_size=hidden, num_layers=2)
    out = jax.block_until_ready(probe_forward(x, params))
    ref = probe_reference(x, params)
    assert out.shape == (batch, out_dim), out.shape
    assert jnp.allclose(out, ref, atol=1e-5, rtol=1e-5), "f32 2-layer mismatch"

    # --- Test 2: f32, module default config (num_layers=1, single Linear) -----
    key, kp1 = jax.random.split(key)
    params1 = init_probe_params(kp1, input_dim, out_dim,
                                hidden_size=hidden, num_layers=1)
    out1 = jax.block_until_ready(probe_forward(x, params1))
    ref1 = probe_reference(x, params1)
    assert jnp.allclose(out1, ref1, atol=1e-5, rtol=1e-5), "f32 1-layer mismatch"

    # --- Test 3: tiled path with partial final block / batch not % fold -------
    key, kx3 = jax.random.split(key)
    x3 = jax.random.normal(kx3, (41, input_dim), jnp.float32)
    out3 = jax.block_until_ready(probe_forward(x3, params, block_rows=16))
    ref3 = probe_reference(x3, params)
    assert out3.shape == (41, out_dim), out3.shape
    assert jnp.allclose(out3, ref3, atol=1e-5, rtol=1e-5), "tiled/partial mismatch"

    # --- Test 4: bf16 inputs/weights (halved HBM traffic, f32 accumulation) ---
    key, kxb = jax.random.split(key)
    xb = jax.random.normal(kxb, (64, input_dim), jnp.float32).astype(jnp.bfloat16)
    params_b = [(w.astype(jnp.bfloat16), b.astype(jnp.bfloat16)) for w, b in params]
    outb = jax.block_until_ready(probe_forward(xb, params_b))
    refb = probe_reference(xb, params_b)
    assert outb.shape == (64, out_dim), outb.shape
    assert jnp.allclose(outb.astype(jnp.float32), refb.astype(jnp.float32),
                        atol=2e-2, rtol=2e-2), "bf16 mismatch"

    # --- Test 5: auto-tiled multi-step grid (exercises grid>=2 / big-tile path)
    key, kx5 = jax.random.split(key)
    x5 = jax.random.normal(kx5, (2048, input_dim), jnp.float32)
    out5 = jax.block_until_ready(probe_forward(x5, params))
    ref5 = probe_reference(x5, params)
    assert jnp.allclose(out5, ref5, atol=1e-5, rtol=1e-5), "multi-step grid mismatch"

    print("KERNEL_OK")
</pallas_src>

<mosaic_0001>
module attributes {stable_mosaic.version = 11 : i64} {
  func.func @kernel(%arg0: i32, %arg1: memref<8x128xf32, #tpu.memory_space<vmem>>, %arg2: memref<128x256xf32, #tpu.memory_space<vmem>>, %arg3: memref<1x256xf32, #tpu.memory_space<vmem>>, %arg4: memref<256x64xf32, #tpu.memory_space<vmem>>, %arg5: memref<1x64xf32, #tpu.memory_space<vmem>>, %arg6: memref<8x64xf32, #tpu.memory_space<vmem>>) attributes {dimension_semantics = [#tpu.dimension_semantics<parallel>], iteration_bounds = array<i64: 1>, scalar_prefetch = 0 : i64, scratch_operands = 0 : i64, tpu.core_type = #tpu.core_type<tc>, window_params = [{transform_indices = @transform_0, window_bounds = array<i64: 8, 128>}, {pipeline_mode = #tpu.pipeline_mode<synchronous>, transform_indices = @transform_1, window_bounds = array<i64: 128, 256>}, {pipeline_mode = #tpu.pipeline_mode<synchronous>, transform_indices = @transform_2, window_bounds = array<i64: 1, 256>}, {pipeline_mode = #tpu.pipeline_mode<synchronous>, transform_indices = @transform_3, window_bounds = array<i64: 256, 64>}, {pipeline_mode = #tpu.pipeline_mode<synchronous>, transform_indices = @transform_4, window_bounds = array<i64: 1, 64>}, {transform_indices = @transform_5, window_bounds = array<i64: 8, 64>}]} {
    %c0 = arith.constant 0 : index
    %c0_0 = arith.constant 0 : index
    %0 = vector.load %arg1[%c0, %c0_0] : memref<8x128xf32, #tpu.memory_space<vmem>>, vector<8x128xf32>
    %c0_1 = arith.constant 0 : index
    %c0_2 = arith.constant 0 : index
    %1 = vector.load %arg2[%c0_1, %c0_2] : memref<128x256xf32, #tpu.memory_space<vmem>>, vector<128x256xf32>
    %c0_3 = arith.constant 0 : index
    %c0_4 = arith.constant 0 : index
    %2 = vector.load %arg3[%c0_3, %c0_4] : memref<1x256xf32, #tpu.memory_space<vmem>>, vector<1x256xf32>
    %cst = arith.constant dense<0.000000e+00> : vector<8x256xf32>
    %3 = tpu.matmul %0, %1, %cst {dimension_numbers = #tpu.dot_dimension_numbers<[1], [0], [0], [1], [0, 0, 1, 1], [], []>} : vector<8x128xf32>, vector<128x256xf32>, vector<8x256xf32> -> vector<8x256xf32>
    %4 = vector.broadcast %2 : vector<1x256xf32> to vector<8x256xf32>
    %5 = arith.addf %3, %4 : vector<8x256xf32>
    %cst_5 = arith.constant 0.000000e+00 : f32
    %6 = vector.broadcast %cst_5 : f32 to vector<8x256xf32>
    %7 = arith.maximumf %5, %6 : vector<8x256xf32>
    %c0_6 = arith.constant 0 : index
    %c0_7 = arith.constant 0 : index
    %8 = vector.load %arg4[%c0_6, %c0_7] : memref<256x64xf32, #tpu.memory_space<vmem>>, vector<256x64xf32>
    %c0_8 = arith.constant 0 : index
    %c0_9 = arith.constant 0 : index
    %9 = vector.load %arg5[%c0_8, %c0_9] : memref<1x64xf32, #tpu.memory_space<vmem>>, vector<1x64xf32>
    %cst_10 = arith.constant dense<0.000000e+00> : vector<8x64xf32>
    %10 = tpu.matmul %7, %8, %cst_10 {dimension_numbers = #tpu.dot_dimension_numbers<[1], [0], [0], [1], [0, 0, 1, 1], [], []>} : vector<8x256xf32>, vector<256x64xf32>, vector<8x64xf32> -> vector<8x64xf32>
    %11 = vector.broadcast %9 : vector<1x64xf32> to vector<8x64xf32>
    %12 = arith.addf %10, %11 : vector<8x64xf32>
    %c0_11 = arith.constant 0 : index
    %c0_12 = arith.constant 0 : index
    %13 = vector.load %arg6[%c0_11, %c0_12] : memref<8x64xf32, #tpu.memory_space<vmem>>, vector<8x64xf32>
    tpu.vector_store %arg6[%c0_11, %c0_12], %12 {strides = array<i32>} : memref<8x64xf32, #tpu.memory_space<vmem>>, vector<8x64xf32>,
    return
  }
  func.func @transform_0(%arg0: i32) -> (i32, i32) {
    %c0_i32 = arith.constant 0 : i32
    %c0_i32_0 = arith.constant 0 : i32
    return %arg0, %c0_i32 : i32, i32
  }
  func.func @transform_1(%arg0: i32) -> (i32, i32) {
    %c0_i32 = arith.constant 0 : i32
    %c0_i32_0 = arith.constant 0 : i32
    %c0_i32_1 = arith.constant 0 : i32
    return %c0_i32, %c0_i32_0 : i32, i32
  }
  func.func @transform_2(%arg0: i32) -> (i32, i32) {
    %c0_i32 = arith.constant 0 : i32
    %c0_i32_0 = arith.constant 0 : i32
    %c0_i32_1 = arith.constant 0 : i32
    return %c0_i32, %c0_i32_0 : i32, i32
  }
  func.func @transform_3(%arg0: i32) -> (i32, i32) {
    %c0_i32 = arith.constant 0 : i32
    %c0_i32_0 = arith.constant 0 : i32
    %c0_i32_1 = arith.constant 0 : i32
    return %c0_i32, %c0_i32_0 : i32, i32
  }
  func.func @transform_4(%arg0: i32) -> (i32, i32) {
    %c0_i32 = arith.constant 0 : i32
    %c0_i32_0 = arith.constant 0 : i32
    %c0_i32_1 = arith.constant 0 : i32
    return %c0_i32, %c0_i32_0 : i32, i32
  }
  func.func @transform_5(%arg0: i32) -> (i32, i32) {
    %c0_i32 = arith.constant 0 : i32
    %c0_i32_0 = arith.constant 0 : i32
    return %arg0, %c0_i32 : i32, i32
  }
}

</mosaic_0001>

<llo_original>
// kernel: probe_forward.1
$region0: #{probe_forward.1}
  #allocation0 [shape = 'u32[]', space=smem, size = 0x4, offset = 0x4, fixed_abs, tag = 'smem constant byte address 0x4 - core index']
  #allocation1 [shape = 'u32[144,128]{1,0:T(1,128)}', space=vmem, size = 0x12000, scoped, tag = 'internal scratch']
  %s0 = inlined_call_operand.vmem [shape: f32[2,128], index: 0, kind: input, shape index: {}]
  %s1 = inlined_call_operand.vmem [shape: f32[128,256], index: 1, kind: input, shape index: {}]
  %s2 = inlined_call_operand.vmem [shape: f32[1,256], index: 2, kind: input, shape index: {}]
  %s3 = inlined_call_operand.vmem [shape: f32[256,64], index: 3, kind: input, shape index: {}]
  %s4 = inlined_call_operand.vmem [shape: f32[1,64], index: 4, kind: input, shape index: {}]
  %s5 = inlined_call_operand.vmem [shape: f32[2,64], index: 5, kind: output, shape index: {}]
  %s6 = sld [smem:[#allocation0]]
  $region60: #{probe_forward.1} parent=0
    _
  %s8 = ssub.s32 1, %s6
  %s9 = scalar_select 0, %s8, %s6
  $region1: #{probe_forward.1} parent=0
    #allocation2 [shape = 'u8[4096]{0}', space=vmem, size = 0x1000, scoped, tag = 'output window, operand 0, single buffered']
    // Predicated region
    $region2: #{probe_forward.1} parent=1 // pred_check
      _
    $region3: #{probe_forward.1} parent=1 // pred_check_branch
      %11 = sbr.rel (0) target = $region5
    $region4: #{probe_forward.1} parent=1 // pred_region
      _
    $region5: #{probe_forward.1} parent=1 // pred_fallthru
      _
    // Predicated region
    $region6: #{probe_forward.1} parent=1 // pred_check
      _
    $region7: #{probe_forward.1} parent=1 // pred_check_branch
      %13 = sbr.rel (0) target = $region9
    $region8: #{probe_forward.1} parent=1 // pred_region
      _
    $region9: #{probe_forward.1} parent=1 // pred_fallthru
      _
    // Predicated region
    $region10: #{probe_forward.1} parent=1 // pred_check
      _
    $region11: #{probe_forward.1} parent=1 // pred_check_branch
      %15 = sbr.rel (0) target = $region13
    $region12: #{probe_forward.1} parent=1 // pred_region
      _
    $region13: #{probe_forward.1} parent=1 // pred_fallthru
      _
    // Predicated region
    $region14: #{probe_forward.1} parent=1 // pred_check
      _
    $region15: #{probe_forward.1} parent=1 // pred_check_branch
      %17 = sbr.rel (0) target = $region17
    $region16: #{probe_forward.1} parent=1 // pred_region
      _
    $region17: #{probe_forward.1} parent=1 // pred_fallthru
      _
    // Predicated region
    $region18: #{probe_forward.1} parent=1 // pred_check
      _
    $region19: #{probe_forward.1} parent=1 // pred_check_branch
      %19 = sbr.rel (0) target = $region21
    $region20: #{probe_forward.1} parent=1 // pred_region
      _
    $region21: #{probe_forward.1} parent=1 // pred_fallthru
      _
    %v20 = vld [vmem:[%s0] sm:$0xff]
    %v21 = vld [vmem:[%s1] sm:$0xff]
    %v22 = vld [vmem:[%s1 + $0x8] sm:$0xff]
    %v23 = vld [vmem:[%s1 + $0x10] sm:$0xff]
    %v24 = vld [vmem:[%s1 + $0x18] sm:$0xff]
    %v25 = vld [vmem:[%s1 + $0x20] sm:$0xff]
    %v26 = vld [vmem:[%s1 + $0x28] sm:$0xff]
    %v27 = vld [vmem:[%s1 + $0x30] sm:$0xff]
    %v28 = vld [vmem:[%s1 + $0x38] sm:$0xff]
    %v29 = vld [vmem:[%s1 + $0x40] sm:$0xff]
    %v30 = vld [vmem:[%s1 + $0x48] sm:$0xff]
    %v31 = vld [vmem:[%s1 + $0x50] sm:$0xff]
    %v32 = vld [vmem:[%s1 + $0x58] sm:$0xff]
    %v33 = vld [vmem:[%s1 + $0x60] sm:$0xff]
    %v34 = vld [vmem:[%s1 + $0x68] sm:$0xff]
    %v35 = vld [vmem:[%s1 + $0x70] sm:$0xff]
    %v36 = vld [vmem:[%s1 + $0x78] sm:$0xff]
    %v37 = vld [vmem:[%s1 + $0x80] sm:$0xff]
    %v38 = vld [vmem:[%s1 + $0x88] sm:$0xff]
    %v39 = vld [vmem:[%s1 + $0x90] sm:$0xff]
    %v40 = vld [vmem:[%s1 + $0x98] sm:$0xff]
    %v41 = vld [vmem:[%s1 + $0xa0] sm:$0xff]
    %v42 = vld [vmem:[%s1 + $0xa8] sm:$0xff]
    %v43 = vld [vmem:[%s1 + $0xb0] sm:$0xff]
    %v44 = vld [vmem:[%s1 + $0xb8] sm:$0xff]
    %v45 = vld [vmem:[%s1 + $0xc0] sm:$0xff]
    %v46 = vld [vmem:[%s1 + $0xc8] sm:$0xff]
    %v47 = vld [vmem:[%s1 + $0xd0] sm:$0xff]
    %v48 = vld [vmem:[%s1 + $0xd8] sm:$0xff]
    %v49 = vld [vmem:[%s1 + $0xe0] sm:$0xff]
    %v50 = vld [vmem:[%s1 + $0xe8] sm:$0xff]
    %v51 = vld [vmem:[%s1 + $0xf0] sm:$0xff]
    %v52 = vld [vmem:[%s1 + $0xf8] sm:$0xff]
    %v53 = vld [vmem:[%s2] sm:$0x3]
    %v55 = vlaneseq
    %v56 = vshrl.u32 %v55, 7
    %v57 = vsub.s32 0, %v56
    %v58 = vrot.slane %v53, %v57
    %v59 = vlaneseq
    %v60 = vshrl.u32 %v59, 7
    %v61 = vsub.s32 1, %v60
    %v62 = vrot.slane %v53, %v61
    %65 = vmatprep.subr.mxu0 %v22
    %66 = vmatpush1.msra.mxu0 %v21
    %67 = vmatprep.subr.mxu0 %v24
    %68 = vmatpush1.msra.mxu0 %v23
    %69 = vmatprep.subr.mxu0 %v26
    %70 = vmatpush1.msra.mxu0 %v25
    %71 = vmatprep.subr.mxu0 %v28
    %72 = vmatpush1.msra.mxu0 %v27
    %73 = vmatprep.subr.mxu0 %v30
    %74 = vmatpush1.msra.mxu0 %v29
    %75 = vmatprep.subr.mxu0 %v32
    %76 = vmatpush1.msra.mxu0 %v31
    %77 = vmatprep.subr.mxu0 %v34
    %78 = vmatpush1.msra.mxu0 %v33
    %79 = vmatprep.subr.mxu0 %v36
    %80 = vmatpush1.msra.mxu0 %v35
    %81 = vmatprep.subr.mxu0 %v38
    %82 = vmatpush1.msra.mxu0 %v37
    %83 = vmatprep.subr.mxu0 %v40
    %84 = vmatpush1.msra.mxu0 %v39
    %85 = vmatprep.subr.mxu0 %v42
    %86 = vmatpush1.msra.mxu0 %v41
    %87 = vmatprep.subr.mxu0 %v44
    %88 = vmatpush1.msra.mxu0 %v43
    %89 = vmatprep.subr.mxu0 %v46
    %90 = vmatpush1.msra.mxu0 %v45
    %91 = vmatprep.subr.mxu0 %v48
    %92 = vmatpush1.msra.mxu0 %v47
    %93 = vmatprep.subr.mxu0 %v50
    %94 = vmatpush1.msra.mxu0 %v49
    %95 = vmatprep.subr.mxu0 %v52
    %96 = vmatpush1.msra.mxu0 %v51
    %97 = vmatprep.subr.mxu0 0.0
    %98 = vmatpush1.msra.mxu0 0.0
    %99 = vmatprep.subr.mxu0 0.0
    %100 = vmatpush1.msra.mxu0 0.0
    %101 = vmatprep.subr.mxu0 0.0
    %102 = vmatpush1.msra.mxu0 0.0
    %103 = vmatprep.subr.mxu0 0.0
    %104 = vmatpush1.msra.mxu0 0.0
    %105 = vmatprep.subr.mxu0 0.0
    %106 = vmatpush1.msra.mxu0 0.0
    %107 = vmatprep.subr.mxu0 0.0
    %108 = vmatpush1.msra.mxu0 0.0
    %109 = vmatprep.subr.mxu0 0.0
    %110 = vmatpush1.msra.mxu0 0.0
    %111 = vmatprep.subr.mxu0 0.0
    %112 = vmatpush1.msra.mxu0 0.0
    %113 = vmatprep.subr.mxu0 0.0
    %114 = vmatpush1.msra.mxu0 0.0
    %115 = vmatprep.subr.mxu0 0.0
    %116 = vmatpush1.msra.mxu0 0.0
    %117 = vmatprep.subr.mxu0 0.0
    %118 = vmatpush1.msra.mxu0 0.0
    %119 = vmatprep.subr.mxu0 0.0
    %120 = vmatpush1.msra.mxu0 0.0
    %121 = vmatprep.subr.mxu0 0.0
    %122 = vmatpush1.msra.mxu0 0.0
    %123 = vmatprep.subr.mxu0 0.0
    %124 = vmatpush1.msra.mxu0 0.0
    %125 = vmatprep.subr.mxu0 0.0
    %126 = vmatpush1.msra.mxu0 0.0
    %127 = vmatprep.subr.mxu0 0.0
    %128 = vmatpush1.msra.mxu0 0.0
    %129 = vmatprep.mubr.f32.mxu0 0.0
    %130 = vmatmul.mubr.f32.gmra.mrb[0].mxu0 %v20
    %v131 = vpop.f32.mrb[0].mxu0
    %v132 = vadd.f32 %v58, %v131
    %v133 = vpop.f32.mrb[0].mxu0
    %v134 = vadd.f32 %v62, %v133
    %135 = vdwg.mxu0
    %v136 = vmax.f32 %v132, 0.0
    %v137 = vmax.f32 %v134, 0.0
    %v138 = vld [vmem:[%s3] sm:$0xff]
    %v139 = vld [vmem:[%s3 + $0x8] sm:$0xff]
    %v140 = vld [vmem:[%s3 + $0x10] sm:$0xff]
    %v141 = vld [vmem:[%s3 + $0x18] sm:$0xff]
    %v142 = vld [vmem:[%s3 + $0x20] sm:$0xff]
    %v143 = vld [vmem:[%s3 + $0x28] sm:$0xff]
    %v144 = vld [vmem:[%s3 + $0x30] sm:$0xff]
    %v145 = vld [vmem:[%s3 + $0x38] sm:$0xff]
    %v146 = vld [vmem:[%s3 + $0x40] sm:$0xff]
    %v147 = vld [vmem:[%s3 + $0x48] sm:$0xff]
    %v148 = vld [vmem:[%s3 + $0x50] sm:$0xff]
    %v149 = vld [vmem:[%s3 + $0x58] sm:$0xff]
    %v150 = vld [vmem:[%s3 + $0x60] sm:$0xff]
    %v151 = vld [vmem:[%s3 + $0x68] sm:$0xff]
    %v152 = vld [vmem:[%s3 + $0x70] sm:$0xff]
    %v153 = vld [vmem:[%s3 + $0x78] sm:$0xff]
    %v154 = vld [vmem:[%s3 + $0x80] sm:$0xff]
    %v155 = vld [vmem:[%s3 + $0x88] sm:$0xff]
    %v156 = vld [vmem:[%s3 + $0x90] sm:$0xff]
    %v157 = vld [vmem:[%s3 + $0x98] sm:$0xff]
    %v158 = vld [vmem:[%s3 + $0xa0] sm:$0xff]
    %v159 = vld [vmem:[%s3 + $0xa8] sm:$0xff]
    %v160 = vld [vmem:[%s3 + $0xb0] sm:$0xff]
    %v161 = vld [vmem:[%s3 + $0xb8] sm:$0xff]
    %v162 = vld [vmem:[%s3 + $0xc0] sm:$0xff]
    %v163 = vld [vmem:[%s3 + $0xc8] sm:$0xff]
    %v164 = vld [vmem:[%s3 + $0xd0] sm:$0xff]
    %v165 = vld [vmem:[%s3 + $0xd8] sm:$0xff]
    %v166 = vld [vmem:[%s3 + $0xe0] sm:$0xff]
    %v167 = vld [vmem:[%s3 + $0xe8] sm:$0xff]
    %v168 = vld [vmem:[%s3 + $0xf0] sm:$0xff]
    %v169 = vld [vmem:[%s3 + $0xf8] sm:$0xff]
    %v170 = vld [vmem:[%s4] sm:$0x1]
    %v172 = vlaneseq
    %v173 = vshrl.u32 %v172, 7
    %v174 = vsub.s32 0, %v173
    %v175 = vrot.slane %v170, %v174
    %177 = vmatprep.subr.mxu0 0.0
    %178 = vmatpush1.msra.mxu0 %v138
    %179 = vmatprep.subr.mxu0 0.0
    %180 = vmatpush1.msra.mxu0 %v139
    %181 = vmatprep.subr.mxu0 0.0
    %182 = vmatpush1.msra.mxu0 %v140
    %183 = vmatprep.subr.mxu0 0.0
    %184 = vmatpush1.msra.mxu0 %v141
    %185 = vmatprep.subr.mxu0 0.0
    %186 = vmatpush1.msra.mxu0 %v142
    %187 = vmatprep.subr.mxu0 0.0
    %188 = vmatpush1.msra.mxu0 %v143
    %189 = vmatprep.subr.mxu0 0.0
    %190 = vmatpush1.msra.mxu0 %v144
    %191 = vmatprep.subr.mxu0 0.0
    %192 = vmatpush1.msra.mxu0 %v145
    %193 = vmatprep.subr.mxu0 0.0
    %194 = vmatpush1.msra.mxu0 %v146
    %195 = vmatprep.subr.mxu0 0.0
    %196 = vmatpush1.msra.mxu0 %v147
    %197 = vmatprep.subr.mxu0 0.0
    %198 = vmatpush1.msra.mxu0 %v148
    %199 = vmatprep.subr.mxu0 0.0
    %200 = vmatpush1.msra.mxu0 %v149
    %201 = vmatprep.subr.mxu0 0.0
    %202 = vmatpush1.msra.mxu0 %v150
    %203 = vmatprep.subr.mxu0 0.0
    %204 = vmatpush1.msra.mxu0 %v151
    %205 = vmatprep.subr.mxu0 0.0
    %206 = vmatpush1.msra.mxu0 %v152
    %207 = vmatprep.subr.mxu0 0.0
    %208 = vmatpush1.msra.mxu0 %v153
    %209 = vmatprep.subr.mxu0 0.0
    %210 = vmatpush1.msra.mxu0 %v154
    %211 = vmatprep.subr.mxu0 0.0
    %212 = vmatpush1.msra.mxu0 %v155
    %213 = vmatprep.subr.mxu0 0.0
    %214 = vmatpush1.msra.mxu0 %v156
    %215 = vmatprep.subr.mxu0 0.0
    %216 = vmatpush1.msra.mxu0 %v157
    %217 = vmatprep.subr.mxu0 0.0
    %218 = vmatpush1.msra.mxu0 %v158
    %219 = vmatprep.subr.mxu0 0.0
    %220 = vmatpush1.msra.mxu0 %v159
    %221 = vmatprep.subr.mxu0 0.0
    %222 = vmatpush1.msra.mxu0 %v160
    %223 = vmatprep.subr.mxu0 0.0
    %224 = vmatpush1.msra.mxu0 %v161
    %225 = vmatprep.subr.mxu0 0.0
    %226 = vmatpush1.msra.mxu0 %v162
    %227 = vmatprep.subr.mxu0 0.0
    %228 = vmatpush1.msra.mxu0 %v163
    %229 = vmatprep.subr.mxu0 0.0
    %230 = vmatpush1.msra.mxu0 %v164
    %231 = vmatprep.subr.mxu0 0.0
    %232 = vmatpush1.msra.mxu0 %v165
    %233 = vmatprep.subr.mxu0 0.0
    %234 = vmatpush1.msra.mxu0 %v166
    %235 = vmatprep.subr.mxu0 0.0
    %236 = vmatpush1.msra.mxu0 %v167
    %237 = vmatprep.subr.mxu0 0.0
    %238 = vmatpush1.msra.mxu0 %v168
    %239 = vmatprep.subr.mxu0 0.0
    %240 = vmatpush1.msra.mxu0 %v169
    %241 = vmatprep.mubr.f32.mxu0 %v137
    %242 = vmatmul.mubr.f32.gmra.mrb[0].mxu0 %v136
    %v243 = vpop.f32.mrb[0].mxu0
    %v244 = vadd.f32 %v175, %v243
    %v245 = vpop.f32.mrb[0].mxu0
    %246 = vdwg.mxu0
    %vm247 = vcmask 523264
    %248 = vst.msk [vmem:[#allocation2] sm:$0xff] %vm247, %v244
    // Predicated region
    $region22: #{probe_forward.1} parent=1 // pred_check
      _
    $region23: #{probe_forward.1} parent=1 // pred_check_branch
      %250 = sbr.rel (0) target = $region25
    $region24: #{probe_forward.1} parent=1 // pred_region
      // Predicated region
      $region26: #{probe_forward.1} parent=24 // pred_check
        _
      $region27: #{probe_forward.1} parent=24 // pred_check_branch
        %252 = sbr.rel (0) target = $region29
      $region28: #{probe_forward.1} parent=24 // pred_region
        // Predicated region
        $region30: #{probe_forward.1} parent=28 // pred_check
          _
        $region31: #{probe_forward.1} parent=28 // pred_check_branch
          %254 = sbr.rel target = $region33
        $region32: #{probe_forward.1} parent=28 // pred_region
          // Predicated region
          $region45: #{probe_forward.1} parent=32 // pred_check
            _
          $region46: #{probe_forward.1} parent=32 // pred_check_branch
            %269 = sbr.rel (0) target = $region48
          $region47: #{probe_forward.1} parent=32 // pred_region
            loop: start=0, step=1, limit=1
            $region49: #{probe_forward.1} parent=47 // loop_pre_header
              _
            $region50: #{probe_forward.1} parent=47 // loop_header
              %s272 = sphi 0, %s276
              %p273 = scmp.ge.s32.totalorder %s272, 1
              %s277 = sphi [#allocation2], [#allocation2]
              %s278 = sphi %s5, %s5
            $region51: #{probe_forward.1} parent=47 // loop_header_branch
              %275 = sbr.rel (%p273) target = $region55
            $region52: #{probe_forward.1} parent=47 // loop_body
              %v279 = vld [vmem:[%s277] sm:$0x3]
              %280 = vst [vmem:[%s278] sm:$0x3] %v279
            $region53: #{probe_forward.1} parent=47 // loop_footer
              %s276 = sadd.s32 1, %s272
            $region54: #{probe_forward.1} parent=47 // loop_footer_branch
              %271 = sbr.rel target = $region50
            $region55: #{probe_forward.1} parent=47 // loop_exit
              _
          $region48: #{probe_forward.1} parent=32 // pred_fallthru
            _
        $region33: #{probe_forward.1} parent=28 // pred_fallthru
          _
        // Predicated region
        $region34: #{probe_forward.1} parent=28 // pred_check
          _
        $region35: #{probe_forward.1} parent=28 // pred_check_branch
          %256 = sbr.rel (0) target = $region37
        $region36: #{probe_forward.1} parent=28 // pred_region
          loop: start=0, step=1, limit=1
          $region38: #{probe_forward.1} parent=36 // loop_pre_header
            _
          $region39: #{probe_forward.1} parent=36 // loop_header
            %s259 = sphi 0, %s263
            %p260 = scmp.ge.s32.totalorder %s259, 1
            %s264 = sphi [#allocation2], [#allocation2]
            %s265 = sphi %s5, %s5
          $region40: #{probe_forward.1} parent=36 // loop_header_branch
            %262 = sbr.rel (%p260) target = $region44
          $region41: #{probe_forward.1} parent=36 // loop_body
            %v266 = vld [vmem:[%s264] sm:$0x3]
            %267 = vst [vmem:[%s265] sm:$0x3] %v266
          $region42: #{probe_forward.1} parent=36 // loop_footer
            %s263 = sadd.s32 1, %s259
          $region43: #{probe_forward.1} parent=36 // loop_footer_branch
            %258 = sbr.rel target = $region39
          $region44: #{probe_forward.1} parent=36 // loop_exit
            _
        $region37: #{probe_forward.1} parent=28 // pred_fallthru
          _
      $region29: #{probe_forward.1} parent=24 // pred_fallthru
        _
      %281 = vnop
    $region25: #{probe_forward.1} parent=1 // pred_fallthru
      _
    // Predicated region
    $region56: #{probe_forward.1} parent=1 // pred_check
      _
    $region57: #{probe_forward.1} parent=1 // pred_check_branch
      %283 = sbr.rel (0) target = $region59
    $region58: #{probe_forward.1} parent=1 // pred_region
      _
    $region59: #{probe_forward.1} parent=1 // pred_fallthru
      _

</llo_original>
